<compile_context>
chip_gen: v6e
topology: v6e:2x2x1
jax: 0.10.0
libtpu: 0.0.40
codegen_flags: <defaults>
</compile_context>

<pallas_src>
import functools
import math

import jax
import jax.numpy as jnp
from jax import lax
from jax.experimental import pallas as pl
from jax.experimental.pallas import tpu as pltpu

_OUT_LANES = 128


def _sinkhorn_kernel(c_ref, o_ref, u_ref, v_ref, done_ref, *,
                     eps, max_iter, p1, p2, n_total, thresh):
    nb, p1p, p2p = c_ref.shape
    C = c_ref[...].astype(jnp.float32)            # (nb, p1p, p2p), f32 math

    inv_eps = jnp.float32(1.0 / eps)
    eps_f = jnp.float32(eps)
    neg_big = jnp.float32(-1e30)

    # uniform marginals -> compile-time log constants (PyTorch: log(1/p + 1e-8))
    log_mu = jnp.float32(math.log(1.0 / p1 + 1e-8))
    log_nu = jnp.float32(math.log(1.0 / p2 + 1e-8))

    # validity masks for padded point axes and padded batch rows of this tile
    row_valid3 = lax.broadcasted_iota(jnp.int32, (1, p1p, 1), 1) < p1
    col_valid3 = lax.broadcasted_iota(jnp.int32, (1, 1, p2p), 2) < p2
    row_valid2 = lax.broadcasted_iota(jnp.int32, (1, p1p), 1) < p1
    b_ids = pl.program_id(0) * nb + lax.broadcasted_iota(jnp.int32, (nb, 1), 0)
    bmask = (b_ids < n_total).astype(jnp.float32)            # (nb, 1)
    bcount = jnp.maximum(jnp.sum(bmask), 1.0)

    # hoisted per-iteration scaling: M = Cn + u/eps + v/eps, duals pre-scaled
    Cn = C * (-inv_eps)

    def lse_cols(m):
        # logsumexp over the (padded) truth axis, ignoring padded columns
        m = jnp.where(col_valid3, m, neg_big)
        mx = jnp.max(m, axis=-1, keepdims=True)
        s = jnp.sum(jnp.exp(m - mx), axis=-1, keepdims=True)
        return jnp.squeeze(mx + jnp.log(s), axis=-1)         # (nb, p1p)

    def lse_rows(m):
        # logsumexp over the (padded) pred axis, ignoring padded rows
        m = jnp.where(row_valid3, m, neg_big)
        mx = jnp.max(m, axis=-2, keepdims=True)
        s = jnp.sum(jnp.exp(m - mx), axis=-2, keepdims=True)
        return jnp.squeeze(mx + jnp.log(s), axis=-2)         # (nb, p2p)

    # per-tile state (scratch persists across grid steps -> re-init every tile)
    u_ref[...] = jnp.zeros_like(u_ref)
    v_ref[...] = jnp.zeros_like(v_ref)
    done_ref[0] = jnp.int32(0)

    def step(_, carry):
        @pl.when(done_ref[0] == 0)   # early exit: skip work once converged
        def _():
            us = u_ref[...]                                   # u / eps
            vs = v_ref[...]                                   # v / eps
            M1 = Cn + us[:, :, None] + vs[:, None, :]
            us_new = (log_mu - lse_cols(M1)) + us
            # second half-iteration reuses M1: only the u-term changed
            M2 = M1 + (us_new - us)[:, :, None]
            vs_new = (log_nu - lse_rows(M2)) + vs
            # PyTorch convergence check: err = mean_b( sum_i |u_new - u| )
            du = jnp.where(row_valid2, jnp.abs(us_new - us), 0.0)   # (nb, p1p)
            per_b = jnp.sum(du, axis=-1, keepdims=True)             # (nb, 1)
            err = eps_f * jnp.sum(per_b * bmask) / bcount
            u_ref[...] = us_new
            v_ref[...] = vs_new
            done_ref[0] = (err < thresh).astype(jnp.int32)
        return carry

    lax.fori_loop(0, max_iter, step, 0)

    # transport plan and regularized OT cost (padding masked to zero weight)
    us = u_ref[...]
    vs = v_ref[...]
    Mf = Cn + us[:, :, None] + vs[:, None, :]
    Mf = jnp.where(jnp.logical_and(row_valid3, col_valid3), Mf, neg_big)
    pi = jnp.exp(Mf)
    cost_b = jnp.sum(jnp.sum(pi * C, axis=-1), axis=-1, keepdims=True)  # (nb,1)
    # broadcast across all 128 output lanes -> unmasked full-lane store
    o_ref[...] = jnp.broadcast_to(cost_b[None, :, :],
                                  (1, nb, _OUT_LANES)).astype(o_ref.dtype)


def _round_up(x, m):
    return ((x + m - 1) // m) * m


def sinkhorn_distance(cost, pred, truth, *, eps, max_iter, reduction="none",
                      thresh=0.1, batch_block=None):
    """JAX/Pallas equivalent of SinkhornDistance.forward(cost, pred, truth)."""
    cost = jnp.asarray(cost)
    if not jnp.issubdtype(cost.dtype, jnp.floating):
        cost = cost.astype(jnp.float32)
    squeeze_batch = cost.ndim == 2
    if squeeze_batch:
        cost = cost[None]
    n, p1, p2 = cost.shape
    assert pred.shape[-2] == p1 and truth.shape[-2] == p2

    # TPU-friendly padding: pred points -> sublanes (x8), truth points -> lanes (x128)
    p1p = _round_up(max(p1, 8), 8)
    p2p = _round_up(max(p2, 128), 128)

    # batch tile so (2 pipeline buffers + full-size per-iteration temporaries)
    # stays well inside the v7x 64 MiB VMEM ceiling.
    bytes_per_elem = p1p * p2p * 4
    if batch_block is None:
        budget = 40 * 1024 * 1024
        batch_block = max(1, min(n, budget // max(1, 10 * bytes_per_elem)))
    nb = int(max(1, min(n, batch_block)))
    g = -(-n // nb)
    n_pad = g * nb

    # zero-padded cost; dtype is preserved (bf16 input halves the HBM->VMEM DMA,
    # iteration math is still f32 inside the kernel).
    c_pad = jnp.pad(cost, ((0, n_pad - n), (0, p1p - p1), (0, p2p - p2)))

    vmem_limit = int(min(64 * 1024 * 1024,
                         max(16 * 1024 * 1024, 12 * nb * bytes_per_elem)))

    kernel = functools.partial(
        _sinkhorn_kernel, eps=float(eps), max_iter=int(max_iter),
        p1=p1, p2=p2, n_total=n, thresh=float(thresh))

    out = pl.pallas_call(
        kernel,
        grid=(g,),
        in_specs=[pl.BlockSpec((nb, p1p, p2p), lambda i: (i, 0, 0))],
        out_specs=pl.BlockSpec((1, nb, _OUT_LANES), lambda i: (i, 0, 0)),
        out_shape=jax.ShapeDtypeStruct((g, nb, _OUT_LANES), jnp.float32),
        scratch_shapes=[
            pltpu.VMEM((nb, p1p), jnp.float32),   # u / eps
            pltpu.VMEM((nb, p2p), jnp.float32),   # v / eps
            pltpu.SMEM((1,), jnp.int32),          # converged flag
        ],
        compiler_params=pltpu.CompilerParams(
            dimension_semantics=("parallel",),
            vmem_limit_bytes=vmem_limit),
    )(c_pad)

    res = out[:, :, 0].reshape(n_pad)[:n]                    # (N,)
    if squeeze_batch:
        res = res[0]
    if reduction == "mean":
        res = res.mean()
    elif reduction == "sum":
        res = res.sum()
    return res


if __name__ == "__main__":
    key = jax.random.PRNGKey(0)
    k1, k2 = jax.random.split(key)

    N, P1, P2, D = 4, 8, 8, 4
    pred = jax.random.normal(k1, (N, P1, D), dtype=jnp.float32)
    truth = jax.random.normal(k2, (N, P2, D), dtype=jnp.float32)
    # cost matrix: pairwise squared Euclidean distances (plain-JAX glue)
    cost = jnp.sum((pred[:, :, None, :] - truth[:, None, :, :]) ** 2, axis=-1)

    out = sinkhorn_distance(cost, pred, truth, eps=0.1, max_iter=100,
                            reduction="none", batch_block=2)
    out = jax.block_until_ready(out)
    assert out.shape == (N,) and bool(jnp.all(jnp.isfinite(out)))
    print("KERNEL_OK")
</pallas_src>

<mosaic_0001>
module attributes {stable_mosaic.version = 11 : i64} {
  func.func @_sinkhorn_kernel(%arg0: i32, %arg1: memref<2x8x128xf32, #tpu.memory_space<vmem>>, %arg2: memref<1x2x128xf32, #tpu.memory_space<vmem>>, %arg3: memref<2x8xf32, #tpu.memory_space<vmem>>, %arg4: memref<2x128xf32, #tpu.memory_space<vmem>>, %arg5: memref<1xi32, #tpu.memory_space<smem>>) attributes {dimension_semantics = [#tpu.dimension_semantics<parallel>], iteration_bounds = array<i64: 2>, scalar_prefetch = 0 : i64, scratch_operands = 3 : i64, tpu.core_type = #tpu.core_type<tc>, window_params = [{transform_indices = @transform_0, window_bounds = array<i64: 2, 8, 128>}, {transform_indices = @transform_1, window_bounds = array<i64: 1, 2, 128>}]} {
    %c0 = arith.constant 0 : index
    %c0_0 = arith.constant 0 : index
    %c0_1 = arith.constant 0 : index
    %0 = vector.load %arg1[%c0, %c0_0, %c0_1] : memref<2x8x128xf32, #tpu.memory_space<vmem>>, vector<2x8x128xf32>
    %1 = tpu.iota {dimensions = array<i32: 1>} : vector<1x8x1xi32>
    %c8_i32 = arith.constant 8 : i32
    %2 = vector.broadcast %c8_i32 : i32 to vector<1x8x1xi32>
    %3 = arith.cmpi slt, %1, %2 : vector<1x8x1xi32>
    %4 = tpu.iota {dimensions = array<i32: 2>} : vector<1x1x128xi32>
    %c8_i32_2 = arith.constant 8 : i32
    %5 = vector.broadcast %c8_i32_2 : i32 to vector<1x1x128xi32>
    %6 = arith.cmpi slt, %4, %5 : vector<1x1x128xi32>
    %7 = tpu.iota {dimensions = array<i32: 1>} : vector<1x8xi32>
    %c8_i32_3 = arith.constant 8 : i32
    %8 = vector.broadcast %c8_i32_3 : i32 to vector<1x8xi32>
    %9 = arith.cmpi slt, %7, %8 : vector<1x8xi32>
    %c2_i32 = arith.constant 2 : i32
    %10 = arith.muli %arg0, %c2_i32 : i32
    %11 = tpu.iota {dimensions = array<i32: 0>} : vector<2x1xi32>
    %12 = vector.broadcast %10 : i32 to vector<2x1xi32>
    %13 = arith.addi %12, %11 : vector<2x1xi32>
    %c4_i32 = arith.constant 4 : i32
    %14 = vector.broadcast %c4_i32 : i32 to vector<2x1xi32>
    %15 = arith.cmpi slt, %13, %14 : vector<2x1xi32>
    %16 = arith.extui %15 : vector<2x1xi1> to vector<2x1xi32>
    %17 = arith.sitofp %16 : vector<2x1xi32> to vector<2x1xf32>
    %18 = vector.shape_cast %17 : vector<2x1xf32> to vector<1x2x1xf32>
    %cst = arith.constant dense<0.000000e+00> : vector<1xf32>
    %19 = vector.multi_reduction <add>, %18, %cst [1, 2] : vector<1x2x1xf32> to vector<1xf32>
    %20 = vector.shape_cast %19 : vector<1xf32> to vector<1x1x1xf32>
    %21 = vector.extract %20[0, 0, 0] : f32 from vector<1x1x1xf32>
    %cst_4 = arith.constant 1.000000e+00 : f32
    %22 = arith.maximumf %21, %cst_4 : f32
    %cst_5 = arith.constant 0.000000e+00 : f32
    %cst_6 = arith.constant 1.000000e+01 : f32
    %23 = arith.subf %cst_5, %cst_6 : f32
    %24 = vector.broadcast %23 : f32 to vector<2x8x128xf32>
    %25 = arith.mulf %0, %24 : vector<2x8x128xf32>
    %cst_7 = arith.constant 0.000000e+00 : f32
    %26 = vector.broadcast %cst_7 : f32 to vector<2x8xf32>
    %c0_8 = arith.constant 0 : index
    %c0_9 = arith.constant 0 : index
    %27 = vector.load %arg3[%c0_8, %c0_9] : memref<2x8xf32, #tpu.memory_space<vmem>>, vector<2x8xf32>
    tpu.vector_store %arg3[%c0_8, %c0_9], %26 {strides = array<i32>} : memref<2x8xf32, #tpu.memory_space<vmem>>, vector<2x8xf32>,
    %cst_10 = arith.constant 0.000000e+00 : f32
    %28 = vector.broadcast %cst_10 : f32 to vector<2x128xf32>
    %c0_11 = arith.constant 0 : index
    %c0_12 = arith.constant 0 : index
    %29 = vector.load %arg4[%c0_11, %c0_12] : memref<2x128xf32, #tpu.memory_space<vmem>>, vector<2x128xf32>
    tpu.vector_store %arg4[%c0_11, %c0_12], %28 {strides = array<i32>} : memref<2x128xf32, #tpu.memory_space<vmem>>, vector<2x128xf32>,
    %c0_i32 = arith.constant 0 : i32
    %c0_13 = arith.constant 0 : index
    %30 = memref.load %arg5[%c0_13] : memref<1xi32, #tpu.memory_space<smem>>
    memref.store %c0_i32, %arg5[%c0_13] : memref<1xi32, #tpu.memory_space<smem>>
    %cst_14 = arith.constant -1.000000e+30 : f32
    %cst_15 = arith.constant -2.07944155 : f32
    %cst_16 = arith.constant -2.07944155 : f32
    %cst_17 = arith.constant 1.000000e-01 : f32
    %c0_i32_18 = arith.constant 0 : i32
    %c100_i32 = arith.constant 100 : i32
    %31 = arith.addi %c0_i32_18, %c100_i32 : i32
    %c1_i32 = arith.constant 1 : i32
    scf.for %arg6 = %c0_i32_18 to %31 step %c1_i32  : i32 {
      %c0_29 = arith.constant 0 : index
      %56 = memref.load %arg5[%c0_29] : memref<1xi32, #tpu.memory_space<smem>>
      %c0_i32_30 = arith.constant 0 : i32
      %57 = arith.cmpi eq, %56, %c0_i32_30 : i32
      %58 = arith.extui %57 : i1 to i32
      %c0_i32_31 = arith.constant 0 : i32
      %59 = arith.cmpi ne, %58, %c0_i32_31 : i32
      scf.if %59 {
        %c0_32 = arith.constant 0 : index
        %c0_33 = arith.constant 0 : index
        %60 = vector.load %arg3[%c0_32, %c0_33] : memref<2x8xf32, #tpu.memory_space<vmem>>, vector<2x8xf32>
        %c0_34 = arith.constant 0 : index
        %c0_35 = arith.constant 0 : index
        %61 = vector.load %arg4[%c0_34, %c0_35] : memref<2x128xf32, #tpu.memory_space<vmem>>, vector<2x128xf32>
        %62 = vector.shape_cast %60 : vector<2x8xf32> to vector<2x8x1xf32>
        %63 = vector.broadcast %62 : vector<2x8x1xf32> to vector<2x8x128xf32>
        %64 = arith.addf %25, %63 : vector<2x8x128xf32>
        %65 = vector.shape_cast %61 : vector<2x128xf32> to vector<2x1x128xf32>
        %66 = vector.broadcast %65 : vector<2x1x128xf32> to vector<2x8x128xf32>
        %67 = arith.addf %64, %66 : vector<2x8x128xf32>
        %68 = vector.shape_cast %6 : vector<1x1x128xi1> to vector<1x1x128xi1>
        %69 = vector.broadcast %68 : vector<1x1x128xi1> to vector<2x8x128xi1>
        %70 = vector.broadcast %cst_14 : f32 to vector<2x8x128xf32>
        %71 = arith.select %69, %67, %70 : vector<2x8x128xi1>, vector<2x8x128xf32>
        %cst_36 = arith.constant dense<0xFF800000> : vector<2x8xf32>
        %72 = vector.multi_reduction <maximumf>, %71, %cst_36 [2] : vector<2x8x128xf32> to vector<2x8xf32>
        %73 = vector.shape_cast %72 : vector<2x8xf32> to vector<2x8x1xf32>
        %74 = vector.broadcast %73 : vector<2x8x1xf32> to vector<2x8x128xf32>
        %75 = arith.subf %71, %74 : vector<2x8x128xf32>
        %76 = math.exp %75 : vector<2x8x128xf32>
        %cst_37 = arith.constant dense<0.000000e+00> : vector<2x8xf32>
        %77 = vector.multi_reduction <add>, %76, %cst_37 [2] : vector<2x8x128xf32> to vector<2x8xf32>
        %78 = vector.shape_cast %77 : vector<2x8xf32> to vector<2x8x1xf32>
        %79 = math.log %78 : vector<2x8x1xf32>
        %80 = arith.addf %73, %79 : vector<2x8x1xf32>
        %81 = vector.shape_cast %80 : vector<2x8x1xf32> to vector<2x8xf32>
        %82 = vector.broadcast %cst_15 : f32 to vector<2x8xf32>
        %83 = arith.subf %82, %81 : vector<2x8xf32>
        %84 = arith.addf %83, %60 : vector<2x8xf32>
        %85 = arith.subf %84, %60 : vector<2x8xf32>
        %86 = vector.shape_cast %85 : vector<2x8xf32> to vector<2x8x1xf32>
        %87 = vector.broadcast %86 : vector<2x8x1xf32> to vector<2x8x128xf32>
        %88 = arith.addf %67, %87 : vector<2x8x128xf32>
        %89 = vector.shape_cast %3 : vector<1x8x1xi1> to vector<1x8x1xi1>
        %90 = vector.broadcast %89 : vector<1x8x1xi1> to vector<2x8x128xi1>
        %91 = vector.broadcast %cst_14 : f32 to vector<2x8x128xf32>
        %92 = arith.select %90, %88, %91 : vector<2x8x128xi1>, vector<2x8x128xf32>
        %cst_38 = arith.constant dense<0xFF800000> : vector<2x128xf32>
        %93 = vector.multi_reduction <maximumf>, %92, %cst_38 [1] : vector<2x8x128xf32> to vector<2x128xf32>
        %94 = vector.shape_cast %93 : vector<2x128xf32> to vector<2x1x128xf32>
        %95 = vector.broadcast %94 : vector<2x1x128xf32> to vector<2x8x128xf32>
        %96 = arith.subf %92, %95 : vector<2x8x128xf32>
        %97 = math.exp %96 : vector<2x8x128xf32>
        %cst_39 = arith.constant dense<0.000000e+00> : vector<2x128xf32>
        %98 = vector.multi_reduction <add>, %97, %cst_39 [1] : vector<2x8x128xf32> to vector<2x128xf32>
        %99 = vector.shape_cast %98 : vector<2x128xf32> to vector<2x1x128xf32>
        %100 = math.log %99 : vector<2x1x128xf32>
        %101 = arith.addf %94, %100 : vector<2x1x128xf32>
        %102 = vector.shape_cast %101 : vector<2x1x128xf32> to vector<2x128xf32>
        %103 = vector.broadcast %cst_16 : f32 to vector<2x128xf32>
        %104 = arith.subf %103, %102 : vector<2x128xf32>
        %105 = arith.addf %104, %61 : vector<2x128xf32>
        %106 = arith.subf %84, %60 : vector<2x8xf32>
        %107 = math.absf %106 : vector<2x8xf32>
        %cst_40 = arith.constant 0.000000e+00 : f32
        %108 = vector.shape_cast %9 : vector<1x8xi1> to vector<1x8xi1>
        %109 = vector.broadcast %108 : vector<1x8xi1> to vector<2x8xi1>
        %110 = vector.broadcast %cst_40 : f32 to vector<2x8xf32>
        %111 = arith.select %109, %107, %110 : vector<2x8xi1>, vector<2x8xf32>
        %cst_41 = arith.constant dense<0.000000e+00> : vector<2xf32>
        %112 = vector.multi_reduction <add>, %111, %cst_41 [1] : vector<2x8xf32> to vector<2xf32>
        %113 = vector.shape_cast %112 : vector<2xf32> to vector<2x1xf32>
        %114 = arith.mulf %113, %17 : vector<2x1xf32>
        %115 = vector.shape_cast %114 : vector<2x1xf32> to vector<1x2x1xf32>
        %cst_42 = arith.constant dense<0.000000e+00> : vector<1xf32>
        %116 = vector.multi_reduction <add>, %115, %cst_42 [1, 2] : vector<1x2x1xf32> to vector<1xf32>
        %117 = vector.shape_cast %116 : vector<1xf32> to vector<1x1x1xf32>
        %118 = vector.extract %117[0, 0, 0] : f32 from vector<1x1x1xf32>
        %119 = arith.mulf %cst_17, %118 : f32
        %120 = arith.divf %119, %22 : f32
        %c0_43 = arith.constant 0 : index
        %c0_44 = arith.constant 0 : index
        %121 = vector.load %arg3[%c0_43, %c0_44] : memref<2x8xf32, #tpu.memory_space<vmem>>, vector<2x8xf32>
        tpu.vector_store %arg3[%c0_43, %c0_44], %84 {strides = array<i32>} : memref<2x8xf32, #tpu.memory_space<vmem>>, vector<2x8xf32>,
        %c0_45 = arith.constant 0 : index
        %c0_46 = arith.constant 0 : index
        %122 = vector.load %arg4[%c0_45, %c0_46] : memref<2x128xf32, #tpu.memory_space<vmem>>, vector<2x128xf32>
        tpu.vector_store %arg4[%c0_45, %c0_46], %105 {strides = array<i32>} : memref<2x128xf32, #tpu.memory_space<vmem>>, vector<2x128xf32>,
        %cst_47 = arith.constant 1.000000e-01 : f32
        %123 = arith.cmpf olt, %120, %cst_47 : f32
        %124 = arith.extui %123 : i1 to i32
        %c0_48 = arith.constant 0 : index
        %125 = memref.load %arg5[%c0_48] : memref<1xi32, #tpu.memory_space<smem>>
        memref.store %124, %arg5[%c0_48] : memref<1xi32, #tpu.memory_space<smem>>
      } else {
      }
    }
    %c0_19 = arith.constant 0 : index
    %c0_20 = arith.constant 0 : index
    %32 = vector.load %arg3[%c0_19, %c0_20] : memref<2x8xf32, #tpu.memory_space<vmem>>, vector<2x8xf32>
    %c0_21 = arith.constant 0 : index
    %c0_22 = arith.constant 0 : index
    %33 = vector.load %arg4[%c0_21, %c0_22] : memref<2x128xf32, #tpu.memory_space<vmem>>, vector<2x128xf32>
    %34 = vector.shape_cast %32 : vector<2x8xf32> to vector<2x8x1xf32>
    %35 = vector.broadcast %34 : vector<2x8x1xf32> to vector<2x8x128xf32>
    %36 = arith.addf %25, %35 : vector<2x8x128xf32>
    %37 = vector.shape_cast %33 : vector<2x128xf32> to vector<2x1x128xf32>
    %38 = vector.broadcast %37 : vector<2x1x128xf32> to vector<2x8x128xf32>
    %39 = arith.addf %36, %38 : vector<2x8x128xf32>
    %40 = vector.broadcast %3 : vector<1x8x1xi1> to vector<1x8x128xi1>
    %41 = vector.broadcast %6 : vector<1x1x128xi1> to vector<1x8x128xi1>
    %42 = arith.andi %40, %41 : vector<1x8x128xi1>
    %cst_23 = arith.constant -1.000000e+30 : f32
    %43 = vector.shape_cast %42 : vector<1x8x128xi1> to vector<1x8x128xi1>
    %44 = vector.broadcast %43 : vector<1x8x128xi1> to vector<2x8x128xi1>
    %45 = vector.broadcast %cst_23 : f32 to vector<2x8x128xf32>
    %46 = arith.select %44, %39, %45 : vector<2x8x128xi1>, vector<2x8x128xf32>
    %47 = math.exp %46 : vector<2x8x128xf32>
    %48 = arith.mulf %47, %0 : vector<2x8x128xf32>
    %cst_24 = arith.constant dense<0.000000e+00> : vector<2x8xf32>
    %49 = vector.multi_reduction <add>, %48, %cst_24 [2] : vector<2x8x128xf32> to vector<2x8xf32>
    %cst_25 = arith.constant dense<0.000000e+00> : vector<2xf32>
    %50 = vector.multi_reduction <add>, %49, %cst_25 [1] : vector<2x8xf32> to vector<2xf32>
    %51 = vector.shape_cast %50 : vector<2xf32> to vector<2x1xf32>
    %52 = vector.shape_cast %51 : vector<2x1xf32> to vector<1x2x1xf32>
    %53 = vector.shape_cast %52 : vector<1x2x1xf32> to vector<1x2x1xf32>
    %54 = vector.broadcast %53 : vector<1x2x1xf32> to vector<1x2x128xf32>
    %c0_26 = arith.constant 0 : index
    %c0_27 = arith.constant 0 : index
    %c0_28 = arith.constant 0 : index
    %55 = vector.load %arg2[%c0_26, %c0_27, %c0_28] : memref<1x2x128xf32, #tpu.memory_space<vmem>>, vector<1x2x128xf32>
    tpu.vector_store %arg2[%c0_26, %c0_27, %c0_28], %54 {strides = array<i32>} : memref<1x2x128xf32, #tpu.memory_space<vmem>>, vector<1x2x128xf32>,
    return
  }
  func.func @transform_0(%arg0: i32) -> (i32, i32, i32) {
    %c0_i32 = arith.constant 0 : i32
    %c0_i32_0 = arith.constant 0 : i32
    %c0_i32_1 = arith.constant 0 : i32
    return %arg0, %c0_i32, %c0_i32_0 : i32, i32, i32
  }
  func.func @transform_1(%arg0: i32) -> (i32, i32, i32) {
    %c0_i32 = arith.constant 0 : i32
    %c0_i32_0 = arith.constant 0 : i32
    %c0_i32_1 = arith.constant 0 : i32
    return %arg0, %c0_i32, %c0_i32_0 : i32, i32, i32
  }
}

</mosaic_0001>

<llo_original>
// kernel: tpu_custom_call.1
$region0: #{tpu_custom_call.1}
  #allocation0 [shape = 'u32[]', space=smem, size = 0x4, offset = 0x4, fixed_abs, tag = 'smem constant byte address 0x4 - core index']
  #allocation1 [shape = 'u32[144,128]{1,0:T(1,128)}', space=vmem, size = 0x12000, scoped, tag = 'internal scratch']
  #allocation2 [shape = 'f32[2,8]{1,0:T(2,128)}', space=vmem, size = 0x400, scoped, tag = 'scratch operand']
  #allocation3 [shape = 'f32[2,128]{1,0:T(2,128)}', space=vmem, size = 0x400, scoped, tag = 'scratch operand']
  #allocation4 [shape = 's32[1]{0:T(128)}', space=smem, size = 0x200, scoped, tag = 'scratch operand']
  %s0 = inlined_call_operand.hbm [shape: f32[4,8,128], index: 0, kind: input, shape index: {}]
  %s1 = inlined_call_operand.hbm [shape: f32[2,2,128], index: 1, kind: output, shape index: {}]
  %s2 = sld [smem:[#allocation0]]
  $region52: #{tpu_custom_call.1} parent=0
    _
  %s4 = ssub.s32 1, %s2
  %s5 = scalar_select 0, %s4, %s2
  $region1: #{tpu_custom_call.1} parent=0
    #allocation5 [shape = 'u8[16384]{0}', space=vmem, size = 0x4000, scoped, tag = 'input window, operand 0']
    #allocation6 [shape = 's32[2]{0}', space=sflag, size = 0x8, scoped, tag = 'scoped memory for tpu_custom_call.1']
    #allocation7 [shape = 's32[2]{0}', space=sflag, size = 0x8, scoped, tag = 'scoped memory for tpu_custom_call.1']
    #allocation8 [shape = 'u8[2048]{0}', space=vmem, size = 0x800, scoped, tag = 'output window, operand 0']
    %6 = vsyncpa [#allocation6], 0
    %s7 = scalar_lea.sflag [#allocation6], 1
    %8 = vsyncpa %s7, 0
    %9 = vsyncpa [#allocation7], 0
    %s10 = scalar_lea.sflag [#allocation7], 1
    %11 = vsyncpa %s10, 0
    loop: start=0, step=1, limit=4
    $region2: #{tpu_custom_call.1} parent=1 // loop_pre_header
      _
    $region3: #{tpu_custom_call.1} parent=1 // loop_header
      %s13 = sphi 0, %s17
      %p14 = scmp.ge.s32.totalorder %s13, 4
      %s23 = sphi 0, %s25
      %s26 = sphi 0, %s23
      %s27 = sphi 0, %s26
      %s43 = sphi 0, %s27
      %s49 = sphi 0, %s51
      %s52 = sphi 0, %s49
      %s53 = sphi 0, %s52
      %s69 = sphi 0, %s53
    $region4: #{tpu_custom_call.1} parent=1 // loop_header_branch
      %16 = sbr.rel (%p14) target = $region8
    $region5: #{tpu_custom_call.1} parent=1 // loop_body
      %s18 = ssub.s32 %s13, 1
      %s19 = ssub.s32 %s13, 2
      %s20 = sadd.s32 %s13, 1
      %s21 = ssub.s32 %s13, %s20
      %p22 = scmp.eq.s32.totalorder %s21, 0
      %s24 = sadd.s32 %s23, 1
      %s25 = scalar_select %p22, %s23, %s24
      %p28 = pneg %p22
      %p29 = scmp.eq.s32.totalorder %s13, 1
      %p30 = por %p28, %p29
      %p31 = scmp.ne.s32.totalorder %s23, %s26
      %p32 = scmp.eq.s32.totalorder %s13, 0
      %p33 = por %p31, %p32
      %p34 = scmp.ne.s32.totalorder %s23, %s26
      %p35 = scmp.eq.s32.totalorder %s18, 1
      %p36 = por %p34, %p35
      %p37 = scmp.ne.s32.totalorder %s26, %s27
      %p38 = scmp.eq.s32.totalorder %s18, 0
      %p39 = por %p37, %p38
      %p40 = scmp.ne.s32.totalorder %s26, %s27
      %p41 = scmp.eq.s32.totalorder %s19, 1
      %p42 = por %p40, %p41
      %p44 = scmp.ne.s32.totalorder %s27, %s43
      %p45 = scmp.eq.s32.totalorder %s19, 0
      %p46 = por %p44, %p45
      %s47 = ssub.s32 %s13, %s20
      %p48 = scmp.eq.s32.totalorder %s47, 0
      %s50 = sadd.s32 %s49, 1
      %s51 = scalar_select %p48, %s49, %s50
      %p54 = pneg %p48
      %p55 = scmp.eq.s32.totalorder %s13, 1
      %p56 = por %p54, %p55
      %p57 = scmp.ne.s32.totalorder %s49, %s52
      %p58 = scmp.eq.s32.totalorder %s13, 0
      %p59 = por %p57, %p58
      %p60 = scmp.ne.s32.totalorder %s49, %s52
      %p61 = scmp.eq.s32.totalorder %s18, 1
      %p62 = por %p60, %p61
      %p63 = scmp.ne.s32.totalorder %s52, %s53
      %p64 = scmp.eq.s32.totalorder %s18, 0
      %p65 = por %p63, %p64
      %p66 = scmp.ne.s32.totalorder %s52, %s53
      %p67 = scmp.eq.s32.totalorder %s19, 1
      %p68 = por %p66, %p67
      %p70 = scmp.ne.s32.totalorder %s53, %s69
      %p71 = scmp.eq.s32.totalorder %s19, 0
      %p72 = por %p70, %p71
      %p73 = scmp.le.s32.totalorder 1, %s13
      %p74 = scmp.lt.s32.totalorder %s13, 3
      %p75 = pnand %p73, %p74
      %p76 = pneg %p75
      // Predicated region
      $region9: #{tpu_custom_call.1} parent=5 // pred_check
        _
      $region10: #{tpu_custom_call.1} parent=5 // pred_check_branch
        %78 = sbr.rel (%p75) target = $region12
      $region11: #{tpu_custom_call.1} parent=5 // pred_region
        %s79 = ssub.s32 %s13, 1
      $region12: #{tpu_custom_call.1} parent=5 // pred_fallthru
        _
      %p80 = scmp.lt.s32.totalorder %s13, 2
      // Predicated region
      $region13: #{tpu_custom_call.1} parent=5 // pred_check
        %p81 = pneg %p80
      $region14: #{tpu_custom_call.1} parent=5 // pred_check_branch
        %83 = sbr.rel (%p81) target = $region16
      $region15: #{tpu_custom_call.1} parent=5 // pred_region
        // Predicated region
        $region17: #{tpu_custom_call.1} parent=15 // pred_check
          %p84 = pneg %p33
        $region18: #{tpu_custom_call.1} parent=15 // pred_check_branch
          %86 = sbr.rel (%p84) target = $region20
        $region19: #{tpu_custom_call.1} parent=15 // pred_region
          %s87 = sand.u32 %s23, 1
          %s88 = scalar_lea.sflag [#allocation6], %s87
          %s89 = sand.u32 %s23, 1
          %s90 = smul.addr %s89, 16
          %s91 = scalar_lea.vmem [#allocation5], %s90
          %s92 = smul.u32 2, %s13
          %s94 = ssub.s32 256, 256
          %95 = vsyncadd %s88, %s94
          %s96 = smul.addr %s92, 128
          %s97 = scalar_lea.hbm %s0, %s96
          %s98 = sshll.u32 %s91, 4
          %s99 = int_to_ptr.vmem [resolvable:$true] %s98
          %104 = dma.hbm_to_vmem [thread:$0]  %s97, 256, %s99, %s88, 128, 128, 8
        $region20: #{tpu_custom_call.1} parent=15 // pred_fallthru
          _
      $region16: #{tpu_custom_call.1} parent=5 // pred_fallthru
        _
      %p105 = scmp.le.s32.totalorder 1, %s13
      %p106 = scmp.lt.s32.totalorder %s13, 3
      %p107 = pnand %p105, %p106
      %p108 = pneg %p107
      // Predicated region
      $region21: #{tpu_custom_call.1} parent=5 // pred_check
        _
      $region22: #{tpu_custom_call.1} parent=5 // pred_check_branch
        %110 = sbr.rel (%p107) target = $region24
      $region23: #{tpu_custom_call.1} parent=5 // pred_region
        %s111 = ssub.s32 %s13, 1
        %s112 = sand.u32 %s26, 1
        %s113 = scalar_lea.sflag [#allocation6], %s112
        %s114 = sand.u32 %s26, 1
        %s115 = smul.addr %s114, 16
        %s116 = scalar_lea.vmem [#allocation5], %s115
        // Predicated region
        $region25: #{tpu_custom_call.1} parent=23 // pred_check
          %p117 = pneg %p39
        $region26: #{tpu_custom_call.1} parent=23 // pred_check_branch
          %119 = sbr.rel (%p117) target = $region28
        $region27: #{tpu_custom_call.1} parent=23 // pred_region
          %120 = dma.done %s113, 256
        $region28: #{tpu_custom_call.1} parent=23 // pred_fallthru
          _
        %s121 = sand.u32 %s26, 1
        %s122 = scalar_lea.sflag [#allocation6], %s121
        %s123 = sand.u32 %s26, 1
        %s124 = smul.addr %s123, 16
        %s125 = scalar_lea.vmem [#allocation5], %s124
        %p126 = pneg %p39
        %p127 = pneg %p36
        %p128 = pneg %p65
        %p129 = pneg %p62
        %s130 = sand.u32 %s52, 1
        %s131 = scalar_lea.sflag [#allocation7], %s130
        %s132 = sand.u32 %s52, 1
        %s133 = smul.addr %s132, 2
        %s134 = scalar_lea.vmem [#allocation8], %s133
        %s135 = smul.u32 2, %s18
        %v136 = vld [vmem:[%s116] sm:$0xff]
        %v137 = vld [vmem:[%s116 + $0x8] sm:$0xff]
        %v138 = vlaneseq
        %v139 = vshrl.u32 %v138, 7
        %vm140 = vcmp.lt.s32.totalorder %v139, 8
        %v141 = vlaneseq
        %v142 = vand.u32 %v141, 127
        %vm143 = vcmp.lt.s32.totalorder %v142, 8
        %s144 = smul.u32 %s18, 2
        %v145 = vstv %s144
        %v146 = vadd.s32 %v145, %v139
        %vm147 = vcmp.lt.s32.totalorder %v146, 4
        %v148 = vsel %vm147, 1, 0
        %v149 = vcvt.s32.f32 %v148
        %vm150 = vcmask 1024
        %v151 = vsel %vm150, %v149, 0.0
        %152 = vadd.xlane.f32.xlu0 %v151
        %v153 = vpop.xlane.xlu0 %152
        %v154 = vrot.slane %v153, 4
        %v155 = vadd.f32 %v153, %v154
        %v156 = vrot.slane %v155, 2
        %v157 = vadd.f32 %v155, %v156
        %v158 = vrot.slane %v157, 1
        %v159 = vadd.f32 %v157, %v158
        %s160 = vtos %v159
        %s161 = smax.f32 %s160, 1.0
        %v162 = vmul.f32 %v136, -10.0
        %v163 = vmul.f32 %v137, -10.0
        %vm164 = vcmask 58368
        %165 = vst.msk [vmem:[#allocation2] sm:$0x3] %vm164, 0.0
        %166 = vst [vmem:[#allocation3] sm:$0x3] 0.0
        %s167 = scalar_lea.smem [#allocation4], 0
        %168 = sst [smem:[%s167]] 0
        loop: start=0, step=1, limit=100
        $region29: #{tpu_custom_call.1} parent=23 // loop_pre_header
          _
        $region30: #{tpu_custom_call.1} parent=23 // loop_header
          %s170 = sphi 0, %s174
          %p171 = scmp.ge.s32.totalorder %s170, 100
        $region31: #{tpu_custom_call.1} parent=23 // loop_header_branch
          %173 = sbr.rel (%p171) target = $region35
        $region32: #{tpu_custom_call.1} parent=23 // loop_body
          %s175 = sld [smem:[#allocation4]]
          %p176 = scmp.eq.s32.totalorder %s175, 0
          // Predicated region
          $region36: #{tpu_custom_call.1} parent=32 // pred_check
            %p177 = pneg %p176
          $region37: #{tpu_custom_call.1} parent=32 // pred_check_branch
            %179 = sbr.rel (%p177) target = $region39
          $region38: #{tpu_custom_call.1} parent=32 // pred_region
            %v180 = vld [vmem:[#allocation2] sm:$0x3]
            %v181 = vld [vmem:[#allocation3] sm:$0x3]
            %v182 = vlaneseq
            %v183 = vshrl.u32 %v182, 7
            %v184 = vsub.s32 0, %v183
            %v185 = vrot.slane %v180, %v184
            %187 = vbcast.lane.b32.xlu0 %v185, 256
            %v188 = vpop.permute.xlu0 %187
            %v189 = vlaneseq
            %v190 = vshrl.u32 %v189, 7
            %v191 = vsub.s32 1, %v190
            %v192 = vrot.slane %v180, %v191
            %194 = vbcast.lane.b32.xlu0 %v192, 256
            %v195 = vpop.permute.xlu0 %194
            %v196 = vadd.f32 %v162, %v188
            %v197 = vadd.f32 %v163, %v195
            %v200 = vunpack.c.l.s4 1966171168
            %v201 = vunpack.c.0.s8 %v200
            %v202 = vlaneseq
            %v203 = vshrl.u32 %v202, 7
            %v204 = vsub.s32 %v201, %v203
            %v205 = vrot.slane %v181, %v204
            %v206 = vcombine.high %v205, %v205
            %v208 = vunpack.c.l.s4 1966171168
            %v209 = vunpack.c.0.s8 %v208
            %v210 = vlaneseq
            %v211 = vshrl.u32 %v210, 7
            %v212 = vsub.s32 %v209, %v211
            %v213 = vrot.slane %v205, %v212
            %v215 = vunpack.c.l.s4 1966171168
            %v216 = vunpack.c.0.s8 %v215
            %v217 = vlaneseq
            %v218 = vshrl.u32 %v217, 7
            %v219 = vsub.s32 %v216, %v218
            %v220 = vrot.slane %v206, %v219
            %v221 = vlaneseq
            %v222 = vshrl.u32 %v221, 7
            %v223 = vsub.s32 0, %v222
            %v224 = vrot.slane %v213, %v223
            %v225 = vlaneseq
            %v226 = vshrl.u32 %v225, 7
            %v227 = vsub.s32 0, %v226
            %v228 = vrot.slane %v220, %v227
            %v231 = vadd.f32 %v196, %v224
            %v232 = vadd.f32 %v197, %v228
            %v233 = vsel %vm143, 1, 0
            %vm234 = vcmp.eq.s32.totalorder %v233, 1
            %v235 = vsel %vm234, %v231, -1e+30
            %v236 = vsel %vm234, %v232, -1e+30
            %237 = vmax.xlane.f32.xlu0 %v235
            %v238 = vpop.xlane.xlu0 %237
            %239 = vmax.xlane.f32.xlu0 %v236
            %v240 = vpop.xlane.xlu0 %239
            %v241 = vsub.f32 %v235, %v238
            %v242 = vsub.f32 %v236, %v240
            %v243 = vmul.f32 %v241, 1.442695
            %v244 = vpow.pop %v243
            %v245 = vmul.f32 %v242, 1.442695
            %v246 = vpow.pop %v245
            %247 = vadd.xlane.f32.xlu0 %v244
            %v248 = vpop.xlane.xlu0 %247
            %249 = vadd.xlane.f32.xlu0 %v246
            %v250 = vpop.xlane.xlu0 %249
            %v251 = vlog2.pop %v248
            %v252 = vmul.f32 %v251, 0.6931472
            %v253 = vlog2.pop %v250
            %v254 = vmul.f32 %v253, 0.6931472
            %v255 = vadd.f32 %v238, %v252
            %v256 = vadd.f32 %v240, %v254
            %v257 = vsub.f32 -2.0794415, %v255
            %v258 = vsub.f32 -2.0794415, %v256
            %v260 = vlaneseq
            %v261 = vshrl.u32 %v260, 7
            %v262 = vsub.s32 0, %v261
            %v263 = vrot.slane %v180, %v262
            %265 = vbcast.lane.b32.xlu0 %v263, 256
            %v266 = vpop.permute.xlu0 %265
            %v267 = vlaneseq
            %v268 = vshrl.u32 %v267, 7
            %v269 = vsub.s32 1, %v268
            %v270 = vrot.slane %v180, %v269
            %272 = vbcast.lane.b32.xlu0 %v270, 256
            %v273 = vpop.permute.xlu0 %272
            %v276 = vadd.f32 %v257, %v266
            %v277 = vadd.f32 %v258, %v273
            %v278 = vsub.f32 %v276, %v266
            %v279 = vsub.f32 %v277, %v273
            %281 = vset.pattern.permute.xlu0 0
            %282 = vperm.xlu0 %281, %v278
            %v283 = vpop.permute.xlu0 %282
            %286 = vset.pattern.permute.xlu0 0
            %287 = vperm.xlu0 %286, %v279
            %v288 = vpop.permute.xlu0 %287
            %v290 = vadd.f32 %v231, %v283
            %v291 = vadd.f32 %v232, %v288
            %v292 = vsel %vm140, 1, 0
            %vm293 = vcmp.eq.s32.totalorder %v292, 1
            %v294 = vsel %vm293, %v290, -1e+30
            %v295 = vsel %vm293, %v291, -1e+30
            %v296 = vrot.slane %v294, 4
            %v297 = vmax.f32 %v294, %v296
            %v298 = vrot.slane %v297, 2
            %v299 = vmax.f32 %v297, %v298
            %v300 = vrot.slane %v299, 1
            %v301 = vmax.f32 %v299, %v300
            %v302 = vrot.slane %v295, 4
            %v303 = vmax.f32 %v295, %v302
            %v304 = vrot.slane %v303, 2
            %v305 = vmax.f32 %v303, %v304
            %v306 = vrot.slane %v305, 1
            %v307 = vmax.f32 %v305, %v306
            %v308 = vsub.f32 %v294, %v301
            %v309 = vsub.f32 %v295, %v307
            %v310 = vmul.f32 %v308, 1.442695
            %v311 = vpow.pop %v310
            %v312 = vmul.f32 %v309, 1.442695
            %v313 = vpow.pop %v312
            %v314 = vrot.slane %v311, 4
            %v315 = vadd.f32 %v311, %v314
            %v316 = vrot.slane %v315, 2
            %v317 = vadd.f32 %v315, %v316
            %v318 = vrot.slane %v317, 1
            %v319 = vadd.f32 %v317, %v318
            %v320 = vrot.slane %v313, 4
            %v321 = vadd.f32 %v313, %v320
            %v322 = vrot.slane %v321, 2
            %v323 = vadd.f32 %v321, %v322
            %v324 = vrot.slane %v323, 1
            %v325 = vadd.f32 %v323, %v324
            %v326 = vlog2.pop %v319
            %v327 = vmul.f32 %v326, 0.6931472
            %v328 = vlog2.pop %v325
            %v329 = vmul.f32 %v328, 0.6931472
            %v330 = vadd.f32 %v301, %v327
            %v331 = vadd.f32 %v307, %v329
            %v332 = vsub.f32 -2.0794415, %v330
            %v333 = vsub.f32 -2.0794415, %v331
            %v334 = vrot.slane %v181, 1
            %v337 = vadd.f32 %v332, %v181
            %v338 = vadd.f32 %v333, %v334
            %v339 = vand.u32 2147483647, %v278
            %v340 = vand.u32 2147483647, %v279
            %343 = vset.pattern.permute.xlu0 0
            %344 = vperm.xlu0 %343, %v339
            %v345 = vpop.permute.xlu0 %344
            %346 = vset.pattern.permute.xlu0 0
            %347 = vperm.xlu0 %346, %v340
            %v348 = vpop.permute.xlu0 %347
            %v349 = vlaneseq
            %v350 = vshrl.u32 %v349, 7
            %v351 = vsub.s32 %v142, %v350
            %v352 = vrot.slane %v345, %v351
            %v353 = vlaneseq
            %v354 = vshrl.u32 %v353, 7
            %v355 = vsub.s32 %v142, %v354
            %v356 = vrot.slane %v348, %v355
            %vm357 = vcmask 1041409
            %v358 = vsel %vm357, %v356, %v352
            %v360 = vsel %vm234, %v358, 0.0
            %v361 = vsel %vm164, %v360, 0.0
            %362 = vadd.xlane.f32.xlu0 %v361
            %v363 = vpop.xlane.xlu0 %362
            %v364 = vmul.f32 %v363, %v149
            %v365 = vsel %vm150, %v364, 0.0
            %366 = vadd.xlane.f32.xlu0 %v365
            %v367 = vpop.xlane.xlu0 %366
            %v368 = vrot.slane %v367, 4
            %v369 = vadd.f32 %v367, %v368
            %v370 = vrot.slane %v369, 2
            %v371 = vadd.f32 %v369, %v370
            %v372 = vrot.slane %v371, 1
            %v373 = vadd.f32 %v371, %v372
            %s374 = vtos %v373
            %s375 = smul.f32 %s374, 0.1
            %v376 = vstv %s161
            %v377 = vrcp.pop %v376
            %s378 = vtos %v377
            %s379 = smul.f32 %s375, %s378
            %382 = vset.pattern.permute.xlu0 0
            %383 = vperm.xlu0 %382, %v276
            %v384 = vpop.permute.xlu0 %383
            %385 = vset.pattern.permute.xlu0 0
            %386 = vperm.xlu0 %385, %v277
            %v387 = vpop.permute.xlu0 %386
            %v388 = vlaneseq
            %v389 = vshrl.u32 %v388, 7
            %v390 = vsub.s32 %v142, %v389
            %v391 = vrot.slane %v384, %v390
            %v392 = vlaneseq
            %v393 = vshrl.u32 %v392, 7
            %v394 = vsub.s32 %v142, %v393
            %v395 = vrot.slane %v387, %v394
            %v396 = vsel %vm357, %v395, %v391
            %398 = vst.msk [vmem:[#allocation2] sm:$0x3] %vm164, %v396
            %v401 = vrot.slane %v338, 7
            %v402 = vsel %vm357, %v401, %v337
            %404 = vst [vmem:[#allocation3] sm:$0x3] %v402
            %p405 = scmp.lt.f32.partialorder %s379, 0.1
            %s406 = scalar_select %p405, 1, 0
            %407 = sst [smem:[%s167]] %s406
          $region39: #{tpu_custom_call.1} parent=32 // pred_fallthru
            _
        $region33: #{tpu_custom_call.1} parent=23 // loop_footer
          %s174 = sadd.s32 1, %s170
        $region34: #{tpu_custom_call.1} parent=23 // loop_footer_branch
          %169 = sbr.rel target = $region30
        $region35: #{tpu_custom_call.1} parent=23 // loop_exit
          _
        %v408 = vld [vmem:[#allocation2] sm:$0x3]
        %v409 = vld [vmem:[#allocation3] sm:$0x3]
        %v410 = vlaneseq
        %v411 = vshrl.u32 %v410, 7
        %v412 = vsub.s32 0, %v411
        %v413 = vrot.slane %v408, %v412
        %415 = vbcast.lane.b32.xlu0 %v413, 256
        %v416 = vpop.permute.xlu0 %415
        %v417 = vlaneseq
        %v418 = vshrl.u32 %v417, 7
        %v419 = vsub.s32 1, %v418
        %v420 = vrot.slane %v408, %v419
        %422 = vbcast.lane.b32.xlu0 %v420, 256
        %v423 = vpop.permute.xlu0 %422
        %v424 = vadd.f32 %v162, %v416
        %v425 = vadd.f32 %v163, %v423
        %v428 = vunpack.c.l.s4 1966171168
        %v429 = vunpack.c.0.s8 %v428
        %v430 = vlaneseq
        %v431 = vshrl.u32 %v430, 7
        %v432 = vsub.s32 %v429, %v431
        %v433 = vrot.slane %v409, %v432
        %v434 = vcombine.high %v433, %v433
        %v436 = vunpack.c.l.s4 1966171168
        %v437 = vunpack.c.0.s8 %v436
        %v438 = vlaneseq
        %v439 = vshrl.u32 %v438, 7
        %v440 = vsub.s32 %v437, %v439
        %v441 = vrot.slane %v433, %v440
        %v443 = vunpack.c.l.s4 1966171168
        %v444 = vunpack.c.0.s8 %v443
        %v445 = vlaneseq
        %v446 = vshrl.u32 %v445, 7
        %v447 = vsub.s32 %v444, %v446
        %v448 = vrot.slane %v434, %v447
        %v449 = vlaneseq
        %v450 = vshrl.u32 %v449, 7
        %v451 = vsub.s32 0, %v450
        %v452 = vrot.slane %v441, %v451
        %v453 = vlaneseq
        %v454 = vshrl.u32 %v453, 7
        %v455 = vsub.s32 0, %v454
        %v456 = vrot.slane %v448, %v455
        %v459 = vadd.f32 %v424, %v452
        %v460 = vadd.f32 %v425, %v456
        %v461 = vsel %vm140, 1, 0
        %vm462 = vcmp.eq.s32.totalorder %v461, 1
        %v463 = vsel %vm143, 1, 0
        %vm464 = vcmp.eq.s32.totalorder %v463, 1
        %vm465 = vmand %vm462, %vm464
        %v466 = vsel %vm465, 1, 0
        %vm467 = vcmp.eq.s32.totalorder %v466, 1
        %v468 = vsel %vm467, %v459, -1e+30
        %v469 = vsel %vm467, %v460, -1e+30
        %v470 = vmul.f32 %v468, 1.442695
        %v471 = vpow.pop %v470
        %v472 = vmul.f32 %v469, 1.442695
        %v473 = vpow.pop %v472
        %v474 = vmul.f32 %v471, %v136
        %v475 = vmul.f32 %v473, %v137
        %476 = vadd.xlane.f32.xlu0 %v474
        %v477 = vpop.xlane.xlu0 %476
        %478 = vadd.xlane.f32.xlu0 %v475
        %v479 = vpop.xlane.xlu0 %478
        %v482 = vlaneseq
        %v483 = vshrl.u32 %v482, 7
        %v484 = vsub.s32 %v142, %v483
        %v485 = vrot.slane %v477, %v484
        %v486 = vlaneseq
        %v487 = vshrl.u32 %v486, 7
        %v488 = vsub.s32 %v142, %v487
        %v489 = vrot.slane %v479, %v488
        %vm490 = vcmask 1041409
        %v491 = vsel %vm490, %v489, %v485
        %v493 = vsel %vm164, %v491, 0.0
        %494 = vadd.xlane.f32.xlu0 %v493
        %v495 = vpop.xlane.xlu0 %494
        %496 = vst [vmem:[%s134] sm:$0x3] %v495
        %s497 = sand.u32 %s52, 1
        %s498 = scalar_lea.sflag [#allocation7], %s497
        %s499 = sand.u32 %s52, 1
        %s500 = smul.addr %s499, 2
        %s501 = scalar_lea.vmem [#allocation8], %s500
        // Predicated region
        $region40: #{tpu_custom_call.1} parent=23 // pred_check
          %p502 = pneg %p62
        $region41: #{tpu_custom_call.1} parent=23 // pred_check_branch
          %504 = sbr.rel (%p502) target = $region43
        $region42: #{tpu_custom_call.1} parent=23 // pred_region
          %s506 = ssub.s32 32, 32
          %507 = vsyncadd %s498, %s506
          %s508 = smul.addr %s18, 32
          %s509 = scalar_lea.hbm %s1, %s508
          %s511 = sshll.u32 %s501, 4
          %s512 = int_to_ptr.vmem [resolvable:$true] %s511
          %514 = dma.vmem_to_hbm [thread:$0]  %s512, 32, %s509, %s498
        $region43: #{tpu_custom_call.1} parent=23 // pred_fallthru
          _
      $region24: #{tpu_custom_call.1} parent=5 // pred_fallthru
        _
      %p515 = scmp.le.s32.totalorder 2, %s13
      // Predicated region
      $region44: #{tpu_custom_call.1} parent=5 // pred_check
        %p516 = pneg %p515
      $region45: #{tpu_custom_call.1} parent=5 // pred_check_branch
        %518 = sbr.rel (%p516) target = $region47
      $region46: #{tpu_custom_call.1} parent=5 // pred_region
        %s519 = ssub.s32 %s13, 2
        // Predicated region
        $region48: #{tpu_custom_call.1} parent=46 // pred_check
          %p520 = pneg %p68
        $region49: #{tpu_custom_call.1} parent=46 // pred_check_branch
          %522 = sbr.rel (%p520) target = $region51
        $region50: #{tpu_custom_call.1} parent=46 // pred_region
          %s523 = sand.u32 %s53, 1
          %s524 = scalar_lea.sflag [#allocation7], %s523
          %s525 = sand.u32 %s53, 1
          %s526 = smul.addr %s525, 2
          %s527 = scalar_lea.vmem [#allocation8], %s526
          %528 = dma.done %s524, 32
        $region51: #{tpu_custom_call.1} parent=46 // pred_fallthru
          _
      $region47: #{tpu_custom_call.1} parent=5 // pred_fallthru
        _
    $region6: #{tpu_custom_call.1} parent=1 // loop_footer
      %s17 = sadd.s32 1, %s13
    $region7: #{tpu_custom_call.1} parent=1 // loop_footer_branch
      %12 = sbr.rel target = $region3
    $region8: #{tpu_custom_call.1} parent=1 // loop_exit
      _
    %529 = vsyncpa [#allocation6], 1
    %s530 = scalar_lea.sflag [#allocation6], 1
    %531 = vsyncpa %s530, 1
    %532 = vsyncpa [#allocation7], 1
    %s533 = scalar_lea.sflag [#allocation7], 1
    %534 = vsyncpa %s533, 1

</llo_original>
